<compile_context>
chip_gen: v7x
topology: tpu7x:2x2x1
jax: 0.10.0
libtpu: 0.0.40
codegen_flags: <defaults>
</compile_context>

<pallas_src>
import jax
import jax.numpy as jnp
from jax.experimental import pallas as pl
from jax.experimental.pallas import tpu as pltpu


_ONEHOT_MAX_VOCAB = 1024   # auto-select the one-hot MXU gather below this V
_V_TILE = 512              # vocab tile for the one-hot contraction


def _round_up(x, m):
    return (x + m - 1) // m * m


def _usable_vmem_bytes():
    """Generation-aware usable VMEM per TensorCore (with compiler headroom)."""
    cap = None
    try:
        cap = int(getattr(pltpu.get_tpu_info(), "vmem_capacity_bytes", 0)) or None
    except Exception:
        cap = None
    if cap is None:
        cap = 64 * 1024 * 1024   # conservative (v7x-sized) fallback
    return int(cap * 0.8)        # ~100 MiB on v5e/v6e, ~51 MiB on v7x


# ---------------------------------------------------------------------------
# Kernel 1: vectorized one-hot MXU gather (small / medium vocab).
# ---------------------------------------------------------------------------
def _gather_onehot_kernel(idx_ref, w_ref, o_ref):
    # idx_ref: VMEM int32 (1, 1, C)  -- per-chunk indices, lane-major
    # w_ref  : VMEM float (V, E)     -- full table, resident (Buffered(1))
    # o_ref  : VMEM float (1, C, E)
    vocab, _ = w_ref.shape
    chunk = o_ref.shape[1]

    idx = jnp.clip(idx_ref[0], 0, vocab - 1)            # (1, C) int32
    n_tiles = (vocab + _V_TILE - 1) // _V_TILE           # static python int

    for t in range(n_tiles):
        v0 = t * _V_TILE
        vt = min(_V_TILE, vocab - v0)
        # Transposed one-hot (vt, C) in bf16 (0/1 exact in bf16); contract its
        # dim 0 against dim 0 of the bf16-cast table tile on the MXU -> (C, E)
        # with f32 accumulation. Result rows are bf16-rounded (documented
        # approximation; use method="loop" for bit-exact rows).
        iota = jax.lax.broadcasted_iota(jnp.int32, (vt, chunk), 0) + v0
        onehot_t = (iota == idx).astype(jnp.bfloat16)            # (vt, C)
        w_tile = w_ref[pl.ds(v0, vt), :].astype(jnp.bfloat16)    # (vt, E)
        part = jax.lax.dot_general(
            onehot_t, w_tile,
            dimension_numbers=(((0,), (0,)), ((), ())),
            preferred_element_type=jnp.float32)                  # (C, E) f32
        if t == 0:
            o_ref[0] = part.astype(o_ref.dtype)
        else:
            o_ref[0] = (o_ref[0].astype(jnp.float32) + part).astype(o_ref.dtype)


# ---------------------------------------------------------------------------
# Kernel 2: exact per-row gather from the resident table, 8 rows per group
#           with one dense (8, E) store per group.
# ---------------------------------------------------------------------------
def _gather_loop_kernel(idx_ref, w_ref, o_ref):
    # idx_ref: SMEM int32 (1, C)   -- per-chunk indices (blocked SMEM in_spec)
    # w_ref  : VMEM float (V, E)   -- full table, resident (Buffered(1))
    # o_ref  : VMEM float (1, C, E)
    vocab = w_ref.shape[0]
    chunk = o_ref.shape[1]
    n_groups = chunk // 8          # chunk is always a multiple of 8

    def group_body(g, carry):
        base = pl.multiple_of(g * 8, 8)
        rows = []
        for r in range(8):         # statically unrolled 8-row gather
            row = jnp.clip(idx_ref[0, base + r], 0, vocab - 1)
            rows.append(w_ref[pl.ds(row, 1), :])
        # One dense (8, E) store per group instead of 8 single-sublane stores.
        o_ref[0, pl.ds(base, 8), :] = jnp.concatenate(rows, axis=0)
        return carry

    jax.lax.fori_loop(0, n_groups, group_body, 0, unroll=2)


# ---------------------------------------------------------------------------
# Wrapper
# ---------------------------------------------------------------------------
def embedding_lookup(weight, idx, *, chunk_rows=1024, method=None):
    """Gather rows of `weight` (V, E) at integer `idx` (...,) -> (..., E)."""
    V, E = weight.shape
    orig_shape = idx.shape
    flat = idx.reshape(-1).astype(jnp.int32)
    N = flat.shape[0]
    if N == 0:
        return jnp.zeros((*orig_shape, E), weight.dtype)

    if method is None:
        method = "onehot" if V <= _ONEHOT_MAX_VOCAB else "loop"

    # Rows per grid step: multiple of 8 (sublane-dense output block).  For
    # larger inputs, aim for >= 2 chunks so both TensorCores get work on v7x.
    C = min(_round_up(chunk_rows, 8), _round_up(N, 8))
    if N >= 256:
        C = min(C, _round_up((N + 1) // 2, 8))
    C = max(C, 8)
    N_pad = _round_up(N, C)
    if N_pad != N:
        flat = jnp.concatenate([flat, jnp.zeros((N_pad - N,), jnp.int32)])
    num_chunks = N_pad // C

    itemsize = jnp.dtype(weight.dtype).itemsize
    table_bytes = V * E * itemsize                       # single-buffered
    out_block_bytes = C * E * itemsize                   # double-buffered
    if method == "onehot":
        vt = min(V, _V_TILE)
        # i32 iota + bool mask + bf16 one-hot + bf16 table tile + f32 partial
        inter_bytes = (4 + 1 + 2) * vt * C + 2 * vt * E + 4 * C * E
        idx_block_bytes = 8 * _round_up(C, 128) * 4      # (1,1,C) i32, padded
    else:
        inter_bytes = 8 * E * 4 * 4                      # small row staging
        idx_block_bytes = 0                              # indices live in SMEM

    usable = _usable_vmem_bytes()
    need = table_bytes + 2 * out_block_bytes + 2 * idx_block_bytes + inter_bytes
    if need > usable:
        # TODO(synk): HBM-streaming DMA gather (memory_space=pl.ANY +
        # pltpu.make_async_copy per row, several copies in flight) for tables
        # too large to be VMEM-resident.
        raise NotImplementedError(
            f"Embedding gather needs ~{need >> 20} MiB of VMEM "
            f"(> {usable >> 20} MiB usable); streaming gather not implemented.")
    vmem_limit = int(min(usable, max(need + (8 << 20), 32 << 20)))

    cparams = pltpu.CompilerParams(
        dimension_semantics=("parallel",),
        vmem_limit_bytes=vmem_limit)
    out_shape = jax.ShapeDtypeStruct((num_chunks, C, E), weight.dtype)
    # Constant index_map + single buffer: table streamed from HBM exactly once.
    table_spec = pl.BlockSpec((V, E), lambda i: (0, 0),
                              pipeline_mode=pl.Buffered(1))

    if method == "onehot":
        idx3d = flat.reshape(num_chunks, 1, C)           # lane-major indices
        out = pl.pallas_call(
            _gather_onehot_kernel,
            out_shape=out_shape,
            grid_spec=pltpu.PrefetchScalarGridSpec(
                num_scalar_prefetch=0,
                grid=(num_chunks,),
                in_specs=[
                    pl.BlockSpec((1, 1, C), lambda i: (i, 0, 0)),  # indices
                    table_spec,                                    # table
                ],
                out_specs=pl.BlockSpec((1, C, E), lambda i: (i, 0, 0)),
            ),
            compiler_params=cparams,
        )(idx3d, weight)
    elif method == "loop":
        idx2d = flat.reshape(num_chunks, C)
        out = pl.pallas_call(
            _gather_loop_kernel,
            out_shape=out_shape,
            grid_spec=pltpu.PrefetchScalarGridSpec(
                num_scalar_prefetch=0,
                grid=(num_chunks,),
                in_specs=[
                    pl.BlockSpec((1, C), lambda i: (i, 0),        # idx -> SMEM
                                 memory_space=pltpu.MemorySpace.SMEM),
                    table_spec,                                   # table
                ],
                out_specs=pl.BlockSpec((1, C, E), lambda i: (i, 0, 0)),
            ),
            compiler_params=cparams,
        )(idx2d, weight)
    else:
        raise ValueError(f"unknown method: {method!r}")

    out = out.reshape(N_pad, E)[:N]
    return out.reshape(*orig_shape, E)


# ---------------------------------------------------------------------------
# Module-equivalent wrapper (matches the PyTorch Word2Vec init & forward).
# ---------------------------------------------------------------------------
def make_word2vec_params(key, vocab_size, embedding_size):
    """Row 0 = zeros (padding_idx=0), rows 1.. ~ U(-0.5/E, 0.5/E), float32."""
    k_i, k_o = jax.random.split(key)
    lim = 0.5 / embedding_size

    def one_table(k):
        body = jax.random.uniform(
            k, (vocab_size - 1, embedding_size),
            minval=-lim, maxval=lim, dtype=jnp.float32)
        return jnp.concatenate(
            [jnp.zeros((1, embedding_size), jnp.float32), body], axis=0)

    return {"ivectors": one_table(k_i), "ovectors": one_table(k_o)}


class Word2VecPallas:
    """forward / forward_i / forward_o mirror the PyTorch Word2Vec (Bundler)."""

    def __init__(self, params):
        self.ivectors = params["ivectors"]
        self.ovectors = params["ovectors"]

    def forward(self, data):
        return self.forward_i(data)

    def forward_i(self, data):
        return embedding_lookup(self.ivectors, data)

    def forward_o(self, data):
        return embedding_lookup(self.ovectors, data)


if __name__ == "__main__":
    VOCAB = 64          # vocab_size (small synthetic)
    EMB = 128           # embedding_size (lane-aligned)
    B, S = 2, 8         # batch of random-walk index sequences

    key = jax.random.PRNGKey(0)
    k_params, k_idx, k_idx2 = jax.random.split(key, 3)

    params = make_word2vec_params(k_params, VOCAB, EMB)
    model = Word2VecPallas(params)

    idx = jax.random.randint(k_idx, (B, S), 0, VOCAB, dtype=jnp.int32)

    # Primary forward (auto-selects the one-hot MXU path for small V).
    out_i = model.forward(idx)
    out_o = model.forward_o(idx)
    # Bit-exact per-group loop path on the same data.
    out_loop = embedding_lookup(params["ivectors"], idx, method="loop")
    jax.block_until_ready(out_i)
    jax.block_until_ready(out_o)
    jax.block_until_ready(out_loop)

    ref_i = jnp.take(params["ivectors"], idx, axis=0)
    ref_o = jnp.take(params["ovectors"], idx, axis=0)

    assert out_i.shape == (B, S, EMB) and out_i.dtype == jnp.float32
    # One-hot path returns bf16-rounded rows (documented approximation).
    assert jnp.allclose(out_i, ref_i, rtol=1e-2, atol=1e-6)
    assert jnp.allclose(out_o, ref_o, rtol=1e-2, atol=1e-6)
    # Loop path is an exact row copy.
    assert jnp.array_equal(out_loop, ref_i)

    # Multi-chunk + padding check (N=1200 rows -> two 600-row chunks).
    idx_big = jax.random.randint(k_idx2, (4, 300), 0, VOCAB, dtype=jnp.int32)
    out_big_oh = embedding_lookup(params["ivectors"], idx_big, method="onehot")
    out_big_lp = embedding_lookup(params["ivectors"], idx_big, method="loop")
    jax.block_until_ready(out_big_oh)
    jax.block_until_ready(out_big_lp)
    ref_big = jnp.take(params["ivectors"], idx_big, axis=0)
    assert out_big_oh.shape == (4, 300, EMB)
    assert jnp.allclose(out_big_oh, ref_big, rtol=1e-2, atol=1e-6)
    assert jnp.array_equal(out_big_lp, ref_big)

    print("KERNEL_OK")
</pallas_src>

<mosaic_0001>
module attributes {stable_mosaic.version = 11 : i64} {
  func.func @_gather_onehot_kernel(%arg0: i32, %arg1: memref<1x1x16xi32, #tpu.memory_space<vmem>>, %arg2: memref<64x128xf32, #tpu.memory_space<vmem>>, %arg3: memref<1x16x128xf32, #tpu.memory_space<vmem>>) attributes {dimension_semantics = [#tpu.dimension_semantics<parallel>], iteration_bounds = array<i64: 1>, scalar_prefetch = 0 : i64, scratch_operands = 0 : i64, tpu.core_type = #tpu.core_type<tc>, window_params = [{transform_indices = @transform_0, window_bounds = array<i64: 1, 1, 16>}, {pipeline_mode = #tpu.pipeline_mode<synchronous>, transform_indices = @transform_1, window_bounds = array<i64: 64, 128>}, {transform_indices = @transform_2, window_bounds = array<i64: 1, 16, 128>}]} {
    %c0 = arith.constant 0 : index
    %c0_0 = arith.constant 0 : index
    %c0_1 = arith.constant 0 : index
    %0 = vector.load %arg1[%c0, %c0_0, %c0_1] : memref<1x1x16xi32, #tpu.memory_space<vmem>>, vector<1x1x16xi32>
    %1 = vector.shape_cast %0 : vector<1x1x16xi32> to vector<1x16xi32>
    %c0_i32 = arith.constant 0 : i32
    %c63_i32 = arith.constant 63 : i32
    %2 = vector.broadcast %c0_i32 : i32 to vector<1x16xi32>
    %3 = arith.maxsi %2, %1 : vector<1x16xi32>
    %4 = vector.broadcast %c63_i32 : i32 to vector<1x16xi32>
    %5 = arith.minsi %4, %3 : vector<1x16xi32>
    %6 = tpu.iota {dimensions = array<i32: 0>} : vector<64x16xi32>
    %c0_i32_2 = arith.constant 0 : i32
    %7 = vector.broadcast %c0_i32_2 : i32 to vector<64x16xi32>
    %8 = arith.addi %6, %7 : vector<64x16xi32>
    %9 = vector.broadcast %5 : vector<1x16xi32> to vector<64x16xi32>
    %10 = arith.cmpi eq, %8, %9 : vector<64x16xi32>
    %11 = arith.extui %10 : vector<64x16xi1> to vector<64x16xi32>
    %12 = arith.sitofp %11 : vector<64x16xi32> to vector<64x16xf32>
    %13 = arith.truncf %12 : vector<64x16xf32> to vector<64x16xbf16>
    %c0_3 = arith.constant 0 : index
    %c0_4 = arith.constant 0 : index
    %14 = vector.load %arg2[%c0_3, %c0_4] : memref<64x128xf32, #tpu.memory_space<vmem>>, vector<64x128xf32>
    %15 = arith.truncf %14 : vector<64x128xf32> to vector<64x128xbf16>
    %cst = arith.constant dense<0.000000e+00> : vector<16x128xf32>
    %16 = tpu.matmul %13, %15, %cst {dimension_numbers = #tpu.dot_dimension_numbers<[0], [0], [1], [1], [0, 1, 1, 1], [], []>} : vector<64x16xbf16>, vector<64x128xbf16>, vector<16x128xf32> -> vector<16x128xf32>
    %c0_5 = arith.constant 0 : index
    %c0_6 = arith.constant 0 : index
    %c0_7 = arith.constant 0 : index
    %17 = vector.load %arg3[%c0_5, %c0_6, %c0_7] : memref<1x16x128xf32, #tpu.memory_space<vmem>>, vector<1x16x128xf32>
    %18 = vector.shape_cast %17 : vector<1x16x128xf32> to vector<16x128xf32>
    %19 = vector.shape_cast %16 : vector<16x128xf32> to vector<1x16x128xf32>
    tpu.vector_store %arg3[%c0_5, %c0_6, %c0_7], %19 {strides = array<i32>} : memref<1x16x128xf32, #tpu.memory_space<vmem>>, vector<1x16x128xf32>,
    return
  }
  func.func @transform_0(%arg0: i32) -> (i32, i32, i32) {
    %c0_i32 = arith.constant 0 : i32
    %c0_i32_0 = arith.constant 0 : i32
    %c0_i32_1 = arith.constant 0 : i32
    return %arg0, %c0_i32, %c0_i32_0 : i32, i32, i32
  }
  func.func @transform_1(%arg0: i32) -> (i32, i32) {
    %c0_i32 = arith.constant 0 : i32
    %c0_i32_0 = arith.constant 0 : i32
    %c0_i32_1 = arith.constant 0 : i32
    return %c0_i32, %c0_i32_0 : i32, i32
  }
  func.func @transform_2(%arg0: i32) -> (i32, i32, i32) {
    %c0_i32 = arith.constant 0 : i32
    %c0_i32_0 = arith.constant 0 : i32
    %c0_i32_1 = arith.constant 0 : i32
    return %arg0, %c0_i32, %c0_i32_0 : i32, i32, i32
  }
}

</mosaic_0001>

<llo_original>
// kernel: tpu_custom_call.1
$region0: #{tpu_custom_call.1}
  #allocation0 [shape = 'u32[]', space=smem, size = 0x4, offset = 0x4, fixed_abs, tag = 'smem constant byte address 0x4 - core index']
  #allocation1 [shape = 'u32[144,128]{1,0:T(1,128)}', space=vmem, size = 0x12000, scoped, tag = 'internal scratch']
  %s0 = inlined_call_operand.hbm [shape: s32[1,1,16], index: 0, kind: input, shape index: {}]
  %s1 = inlined_call_operand.hbm [shape: f32[64,128], index: 1, kind: input, shape index: {}]
  %s2 = inlined_call_operand.hbm [shape: f32[1,16,128], index: 2, kind: output, shape index: {}]
  %s3 = sld [smem:[#allocation0]]
  $region26: #{tpu_custom_call.1} parent=0
    _
  %s5 = ssub.s32 1, %s3
  %s6 = scalar_select 0, %s5, %s3
  $region1: #{tpu_custom_call.1} parent=0
    #allocation2 [shape = 'u8[512]{0}', space=vmem, size = 0x400, scoped, tag = 'input window, operand 0, single buffered']
    #allocation3 [shape = 's32[1]{0}', space=sflag, size = 0x4, scoped, tag = 'scoped memory for tpu_custom_call.1']
    #allocation4 [shape = 's32[1]{0}', space=sflag, size = 0x4, scoped, tag = 'scoped memory for tpu_custom_call.1']
    #allocation5 [shape = 'u8[32768]{0}', space=vmem, size = 0x8000, scoped, tag = 'input window, operand 1, single buffered']
    #allocation6 [shape = 's32[1]{0}', space=sflag, size = 0x4, scoped, tag = 'scoped memory for tpu_custom_call.1']
    #allocation7 [shape = 'u8[8192]{0}', space=vmem, size = 0x2000, scoped, tag = 'output window, operand 0, single buffered']
    %7 = vsyncpa [#allocation3], 0
    %8 = vsyncpa [#allocation6], 0
    %9 = vsyncpa [#allocation4], 0
    // Predicated region
    $region2: #{tpu_custom_call.1} parent=1 // pred_check
      _
    $region3: #{tpu_custom_call.1} parent=1 // pred_check_branch
      %11 = sbr.rel (0) target = $region5
    $region4: #{tpu_custom_call.1} parent=1 // pred_region
      %s13 = ssub.s32 16, 16
      %14 = vsyncadd [#allocation3], %s13
      %s16 = sshll.u32 [#allocation2], 4
      %s17 = int_to_ptr.vmem [resolvable:$true] %s16
      %19 = dma.hbm_to_vmem [thread:$0]  %s0, 16, %s17, [#allocation3]
    $region5: #{tpu_custom_call.1} parent=1 // pred_fallthru
      _
    // Predicated region
    $region6: #{tpu_custom_call.1} parent=1 // pred_check
      _
    $region7: #{tpu_custom_call.1} parent=1 // pred_check_branch
      %21 = sbr.rel (0) target = $region9
    $region8: #{tpu_custom_call.1} parent=1 // pred_region
      %s23 = ssub.s32 1024, 1024
      %24 = vsyncadd [#allocation6], %s23
      %s25 = sshll.u32 [#allocation5], 4
      %s26 = int_to_ptr.vmem [resolvable:$true] %s25
      %31 = dma.hbm_to_vmem [thread:$0]  %s1, 1024, %s26, [#allocation6], 128, 128, 8
    $region9: #{tpu_custom_call.1} parent=1 // pred_fallthru
      _
    // Predicated region
    $region10: #{tpu_custom_call.1} parent=1 // pred_check
      _
    $region11: #{tpu_custom_call.1} parent=1 // pred_check_branch
      %33 = sbr.rel (0) target = $region13
    $region12: #{tpu_custom_call.1} parent=1 // pred_region
      %34 = dma.done [#allocation3], 16
    $region13: #{tpu_custom_call.1} parent=1 // pred_fallthru
      _
    // Predicated region
    $region14: #{tpu_custom_call.1} parent=1 // pred_check
      _
    $region15: #{tpu_custom_call.1} parent=1 // pred_check_branch
      %36 = sbr.rel (0) target = $region17
    $region16: #{tpu_custom_call.1} parent=1 // pred_region
      %37 = dma.done [#allocation6], 1024
    $region17: #{tpu_custom_call.1} parent=1 // pred_fallthru
      _
    %v39 = vld [vmem:[#allocation2] sm:$0x1]
    %vm40 = vcmp.gt.s32.totalorder %v39, 0
    %v41 = vsel %vm40, %v39, 0
    %vm42 = vcmp.lt.s32.totalorder %v41, 63
    %v43 = vsel %vm42, %v41, 63
    %v44 = vlaneseq
    %v45 = vshrl.u32 %v44, 7
    %v46 = vadd.s32 %v45, 8
    %v47 = vadd.s32 %v45, 16
    %v48 = vadd.s32 %v45, 24
    %v49 = vadd.s32 %v45, 32
    %v50 = vadd.s32 %v45, 40
    %v51 = vadd.s32 %v45, 48
    %v52 = vadd.s32 %v45, 56
    %v53 = vlaneseq
    %v54 = vshrl.u32 %v53, 7
    %v55 = vsub.s32 0, %v54
    %v56 = vrot.slane %v43, %v55
    %vm57 = vcmp.eq.s32.totalorder %v45, %v56
    %vm58 = vcmp.eq.s32.totalorder %v46, %v56
    %vm59 = vcmp.eq.s32.totalorder %v47, %v56
    %vm60 = vcmp.eq.s32.totalorder %v48, %v56
    %vm61 = vcmp.eq.s32.totalorder %v49, %v56
    %vm62 = vcmp.eq.s32.totalorder %v50, %v56
    %vm63 = vcmp.eq.s32.totalorder %v51, %v56
    %vm64 = vcmp.eq.s32.totalorder %v52, %v56
    %v65 = vsel %vm57, 1, 0
    %v66 = vsel %vm58, 1, 0
    %v67 = vsel %vm59, 1, 0
    %v68 = vsel %vm60, 1, 0
    %v69 = vsel %vm61, 1, 0
    %v70 = vsel %vm62, 1, 0
    %v71 = vsel %vm63, 1, 0
    %v72 = vsel %vm64, 1, 0
    %v73 = vcvt.s32.f32 %v65
    %v74 = vcvt.s32.f32 %v66
    %v75 = vcvt.s32.f32 %v67
    %v76 = vcvt.s32.f32 %v68
    %v77 = vcvt.s32.f32 %v69
    %v78 = vcvt.s32.f32 %v70
    %v79 = vcvt.s32.f32 %v71
    %v80 = vcvt.s32.f32 %v72
    %v81 = vpack.c.bf16 %v74, %v73
    %v82 = vpack.c.bf16 %v76, %v75
    %v83 = vpack.c.bf16 %v78, %v77
    %v84 = vpack.c.bf16 %v80, %v79
    %v85 = vld [vmem:[#allocation5] sm:$0xff]
    %v86 = vld [vmem:[#allocation5 + $0x8] sm:$0xff]
    %v87 = vld [vmem:[#allocation5 + $0x10] sm:$0xff]
    %v88 = vld [vmem:[#allocation5 + $0x18] sm:$0xff]
    %v89 = vld [vmem:[#allocation5 + $0x20] sm:$0xff]
    %v90 = vld [vmem:[#allocation5 + $0x28] sm:$0xff]
    %v91 = vld [vmem:[#allocation5 + $0x30] sm:$0xff]
    %v92 = vld [vmem:[#allocation5 + $0x38] sm:$0xff]
    %v93 = vpack.c.bf16 %v86, %v85
    %v94 = vpack.c.bf16 %v88, %v87
    %v95 = vpack.c.bf16 %v90, %v89
    %v96 = vpack.c.bf16 %v92, %v91
    %97 = vxpose.xlu0.c.b16.start [1/8] %v81, 128
    %98 = vxpose.xlu0.c.b16.cont [2/8] %v82, 128
    %99 = vxpose.xlu0.c.b16.cont [3/8] %v83, 128
    %100 = vxpose.xlu0.c.b16.cont [4/8] %v84, 128
    %101 = vxpose.xlu0.c.b16.cont [5/8] 0, 128
    %102 = vxpose.xlu0.c.b16.cont [6/8] 0, 128
    %103 = vxpose.xlu0.c.b16.cont [7/8] 0, 128
    %104 = vxpose.xlu0.c.b16.end [8/8] 0, 128
    %v105 = vpop.trf.xlu0
    %v106 = vpop.trf.xlu0
    %v107 = vpop.trf.xlu0
    %v108 = vpop.trf.xlu0
    %v109 = vpop.trf.xlu0
    %v110 = vpop.trf.xlu0
    %v111 = vpop.trf.xlu0
    %v112 = vpop.trf.xlu0
    %vm113 = vcmask 523264
    %v115 = vsel %vm113, %v105, 0
    %117 = vmatprep.subr.bf16.mxu0 0
    %118 = vmatpush1.bf16.msra.mxu0 %v93
    %119 = vmatprep.subr.bf16.mxu0 0
    %120 = vmatpush1.bf16.msra.mxu0 %v94
    %121 = vmatprep.subr.bf16.mxu0 0
    %122 = vmatpush1.bf16.msra.mxu0 %v95
    %123 = vmatprep.subr.bf16.mxu0 0
    %124 = vmatpush1.bf16.msra.mxu0 %v96
    %125 = vmatprep.subr.bf16.mxu0 0
    %126 = vmatpush1.bf16.msra.mxu0 0
    %127 = vmatprep.subr.bf16.mxu0 0
    %128 = vmatpush1.bf16.msra.mxu0 0
    %129 = vmatprep.subr.bf16.mxu0 0
    %130 = vmatpush1.bf16.msra.mxu0 0
    %131 = vmatprep.subr.bf16.mxu0 0
    %132 = vmatpush1.bf16.msra.mxu0 0
    %133 = vmatprep.subr.bf16.mxu0 0
    %134 = vmatpush1.bf16.msra.mxu0 0
    %135 = vmatprep.subr.bf16.mxu0 0
    %136 = vmatpush1.bf16.msra.mxu0 0
    %137 = vmatprep.subr.bf16.mxu0 0
    %138 = vmatpush1.bf16.msra.mxu0 0
    %139 = vmatprep.subr.bf16.mxu0 0
    %140 = vmatpush1.bf16.msra.mxu0 0
    %141 = vmatprep.subr.bf16.mxu0 0
    %142 = vmatpush1.bf16.msra.mxu0 0
    %143 = vmatprep.subr.bf16.mxu0 0
    %144 = vmatpush1.bf16.msra.mxu0 0
    %145 = vmatprep.subr.bf16.mxu0 0
    %146 = vmatpush1.bf16.msra.mxu0 0
    %147 = vmatprep.subr.bf16.mxu0 0
    %148 = vmatpush1.bf16.msra.mxu0 0
    %149 = vmatprep.mubr.bf16.mxu0 0
    %150 = vmatmul.mubr.bf16.gmra.mrb[0].mxu0 %v115
    %v151 = vpop.f32.mrb[0].mxu0
    %v152 = vadd.f32 0.0, %v151
    %v153 = vpop.f32.mrb[0].mxu0
    %v154 = vpop.f32.mrb[0].mxu0
    %v155 = vadd.f32 0.0, %v154
    %v156 = vpop.f32.mrb[0].mxu0
    %157 = vdwg.mxu0
    %158 = vst [vmem:[#allocation7] sm:$0xff] %v152
    %159 = vst [vmem:[#allocation7 + $0x8] sm:$0xff] %v155
    // Predicated region
    $region18: #{tpu_custom_call.1} parent=1 // pred_check
      _
    $region19: #{tpu_custom_call.1} parent=1 // pred_check_branch
      %161 = sbr.rel (0) target = $region21
    $region20: #{tpu_custom_call.1} parent=1 // pred_region
      %s163 = ssub.s32 256, 256
      %164 = vsyncadd [#allocation4], %s163
      %s165 = sshll.u32 [#allocation7], 4
      %s166 = int_to_ptr.vmem [resolvable:$true] %s165
      %171 = dma.vmem_to_hbm [thread:$0]  %s166, 256, %s2, [#allocation4], 128, 128, 8
    $region21: #{tpu_custom_call.1} parent=1 // pred_fallthru
      _
    // Predicated region
    $region22: #{tpu_custom_call.1} parent=1 // pred_check
      _
    $region23: #{tpu_custom_call.1} parent=1 // pred_check_branch
      %173 = sbr.rel (0) target = $region25
    $region24: #{tpu_custom_call.1} parent=1 // pred_region
      %174 = dma.done [#allocation4], 256
    $region25: #{tpu_custom_call.1} parent=1 // pred_fallthru
      _
    %175 = vsyncpa [#allocation3], 1
    %176 = vsyncpa [#allocation6], 1
    %177 = vsyncpa [#allocation4], 1

</llo_original>
